<compile_context>
chip_gen: v6e
topology: v6e:2x2x1
jax: 0.10.0
libtpu: 0.0.40
codegen_flags: <defaults>
</compile_context>

<pallas_src>
import functools

import jax
import jax.numpy as jnp
from jax.experimental import pallas as pl
from jax.experimental.pallas import tpu as pltpu

_BIG_NEG = -1e30


def _kim_conv_kernel(x_ref, w_ref, b_ref, m_ref, o_ref, xpad_ref, *,
                     seq_len, t_out, k_all, pad_left, pad_right):
    # x_ref:   (TB, L, Cin)            batch tile of the input sequence
    # w_ref:   (K_all*Cin, Cout_total) all windows' taps packed into one slab
    # b_ref:   (1, Cout_total)         concatenated biases
    # m_ref:   (T, Cout_total)         0 where a time step is valid for that
    #                                  window's columns, -1e30 otherwise
    # o_ref:   (TB, Cout_total)        relu(max_t conv(x)) for all windows
    # xpad_ref:(TB, Lp, Cin)           VMEM scratch, zero-padded sequence
    tb, _, cin = x_ref.shape

    # Zero only the padding rows (data region is fully overwritten every step,
    # so this stays correct even when the grid is sharded across TensorCores).
    if pad_left > 0:
        xpad_ref[:, :pad_left, :] = jnp.zeros((tb, pad_left, cin), xpad_ref.dtype)
    if pad_right > 0:
        xpad_ref[:, pad_left + seq_len:, :] = jnp.zeros(
            (tb, pad_right, cin), xpad_ref.dtype)
    xpad_ref[:, pad_left:pad_left + seq_len, :] = x_ref[...]

    # im2col: concat the K_all shifted views -> (TB, T, K_all*Cin), then one
    # MXU matmul carries all windows and the whole batch tile at once.
    cols = [xpad_ref[:, k:k + t_out, :] for k in range(k_all)]
    slab = jnp.concatenate(cols, axis=-1).reshape(tb * t_out, k_all * cin)

    y = jnp.dot(slab, w_ref[...], preferred_element_type=jnp.float32)
    y = y.reshape(tb, t_out, -1) + m_ref[...][None]     # mask invalid time steps
    pooled = jnp.max(y, axis=1)                         # max over time
    pooled = pooled + b_ref[...]                        # bias is time-constant
    o_ref[...] = jnp.maximum(pooled, 0.0).astype(o_ref.dtype)   # ReLU


def kim_conv(x, params, *, block_b=None):
    """Fused KimConv forward.

    x:      (B, L, Cin)
    params: list of (weight (Cout, Cin, K) torch layout, bias (Cout,))
    returns (B, sum(Cout))
    """
    B, L, Cin = x.shape
    ks = [int(w.shape[2]) for (w, _) in params]
    couts = [int(w.shape[0]) for (w, _) in params]
    cout_total = sum(couts)

    # Common padded frame covering every window's torch-valid output positions.
    max_pad = max(k // 2 for k in ks)
    starts = [max_pad - k // 2 for k in ks]                 # tap offset per window
    louts = [L + 2 * (k // 2) - k + 1 for k in ks]          # torch output length
    t_out = max(louts)
    k_all = max(s + k for s, k in zip(starts, ks))
    lp = t_out + k_all - 1
    pad_right = lp - L - max_pad

    # Pack all windows into one weight slab + bias + validity mask.
    w_parts, b_parts, m_parts = [], [], []
    for (w, b), s, lo in zip(params, starts, louts):
        cout, _, k = w.shape
        wk = jnp.transpose(w, (2, 1, 0))                          # (K, Cin, Cout)
        wk = jnp.pad(wk, ((s, k_all - s - k), (0, 0), (0, 0)))    # place taps at s
        w_parts.append(wk)
        b_parts.append(b)
        col = jnp.where(jnp.arange(t_out) < lo, 0.0, _BIG_NEG).astype(jnp.float32)
        m_parts.append(jnp.broadcast_to(col[:, None], (t_out, cout)))
    w_all = jnp.concatenate(w_parts, axis=-1).reshape(
        k_all * Cin, cout_total).astype(x.dtype)
    b_all = jnp.concatenate(b_parts).reshape(1, cout_total).astype(jnp.float32)
    mask = jnp.concatenate(m_parts, axis=-1)                      # (T, Cout_total)

    # Batch tiling: output block 2nd-to-last dim must be a multiple of 8 or == B.
    # (Keep TB modest so the im2col slab + scratch fit v7x's 64 MiB VMEM.)
    if block_b is None:
        block_b = 8
    block_b = min(block_b, B)
    if B > 8:
        block_b = max(8, (block_b // 8) * 8)
    else:
        block_b = B
    grid = (pl.cdiv(B, block_b),)

    kernel = functools.partial(
        _kim_conv_kernel, seq_len=L, t_out=t_out, k_all=k_all,
        pad_left=max_pad, pad_right=pad_right)

    itemsize = jnp.dtype(x.dtype).itemsize
    cost = pl.CostEstimate(
        flops=2 * B * t_out * k_all * Cin * cout_total,
        transcendentals=0,
        bytes_accessed=(x.size * itemsize + w_all.size * itemsize
                        + mask.size * 4 + cout_total * 4
                        + B * cout_total * itemsize))

    out = pl.pallas_call(
        kernel,
        out_shape=jax.ShapeDtypeStruct((B, cout_total), x.dtype),
        grid=grid,
        in_specs=[
            pl.BlockSpec((block_b, L, Cin), lambda i: (i, 0, 0)),
            pl.BlockSpec((k_all * Cin, cout_total), lambda i: (0, 0)),
            pl.BlockSpec((1, cout_total), lambda i: (0, 0)),
            pl.BlockSpec((t_out, cout_total), lambda i: (0, 0)),
        ],
        out_specs=pl.BlockSpec((block_b, cout_total), lambda i: (i, 0)),
        scratch_shapes=[pltpu.VMEM((block_b, lp, Cin), x.dtype)],
        compiler_params=pltpu.CompilerParams(
            dimension_semantics=("parallel",)),
        cost_estimate=cost,
    )(x, w_all, b_all, mask)
    return out


def kim_conv_ref(x, params):
    """Pure-JAX reference mirroring the PyTorch forward exactly."""
    xt = jnp.transpose(x, (0, 2, 1))  # (B, Cin, L)  == x.transpose(1, 2)
    outs = []
    for w, b in params:
        pad = w.shape[2] // 2
        y = jax.lax.conv_general_dilated(
            xt, w, window_strides=(1,), padding=[(pad, pad)],
            dimension_numbers=("NCH", "OIH", "NCH"))
        y = y + b[None, :, None]
        outs.append(jnp.max(y, axis=2))
    return jax.nn.relu(jnp.concatenate(outs, axis=1))


if __name__ == "__main__":
    B, L = 2, 16
    inp_dim, out_dim = 8, 16
    windows = [3, 4, 5]   # mixed odd/even exercises the validity mask path

    key = jax.random.PRNGKey(0)
    kx, *kp = jax.random.split(key, 1 + 2 * len(windows))
    x = jax.random.normal(kx, (B, L, inp_dim), dtype=jnp.float32)

    params = []
    for i, w in enumerate(windows):
        kw, kb = kp[2 * i], kp[2 * i + 1]
        scale = 1.0 / jnp.sqrt(inp_dim * w)
        weight = jax.random.uniform(kw, (out_dim, inp_dim, w),
                                    minval=-scale, maxval=scale,
                                    dtype=jnp.float32)
        bias = jax.random.uniform(kb, (out_dim,),
                                  minval=-scale, maxval=scale,
                                  dtype=jnp.float32)
        params.append((weight, bias))

    out = kim_conv(x, params)
    out = jax.block_until_ready(out)

    ref = kim_conv_ref(x, params)
    assert out.shape == (B, out_dim * len(windows))
    assert jnp.allclose(out, ref, atol=2e-5, rtol=2e-5), "mismatch vs reference"

    print("KERNEL_OK")
</pallas_src>

<mosaic_0001>
module attributes {stable_mosaic.version = 11 : i64} {
  func.func @_kim_conv_kernel(%arg0: i32, %arg1: memref<2x16x8xf32, #tpu.memory_space<vmem>>, %arg2: memref<40x48xf32, #tpu.memory_space<vmem>>, %arg3: memref<1x48xf32, #tpu.memory_space<vmem>>, %arg4: memref<17x48xf32, #tpu.memory_space<vmem>>, %arg5: memref<2x48xf32, #tpu.memory_space<vmem>>, %arg6: memref<2x21x8xf32, #tpu.memory_space<vmem>>) attributes {dimension_semantics = [#tpu.dimension_semantics<parallel>], iteration_bounds = array<i64: 1>, scalar_prefetch = 0 : i64, scratch_operands = 1 : i64, tpu.core_type = #tpu.core_type<tc>, window_params = [{transform_indices = @transform_0, window_bounds = array<i64: 2, 16, 8>}, {pipeline_mode = #tpu.pipeline_mode<synchronous>, transform_indices = @transform_1, window_bounds = array<i64: 40, 48>}, {pipeline_mode = #tpu.pipeline_mode<synchronous>, transform_indices = @transform_2, window_bounds = array<i64: 1, 48>}, {pipeline_mode = #tpu.pipeline_mode<synchronous>, transform_indices = @transform_3, window_bounds = array<i64: 17, 48>}, {transform_indices = @transform_4, window_bounds = array<i64: 2, 48>}]} {
    %cst = arith.constant 0.000000e+00 : f32
    %0 = vector.broadcast %cst : f32 to vector<2x2x8xf32>
    %c0 = arith.constant 0 : index
    %c0_0 = arith.constant 0 : index
    %c0_1 = arith.constant 0 : index
    %1 = vector.load %arg6[%c0, %c0_0, %c0_1] : memref<2x21x8xf32, #tpu.memory_space<vmem>>, vector<2x2x8xf32>
    tpu.vector_store %arg6[%c0, %c0_0, %c0_1], %0 {strides = array<i32>} : memref<2x21x8xf32, #tpu.memory_space<vmem>>, vector<2x2x8xf32>,
    %cst_2 = arith.constant 0.000000e+00 : f32
    %2 = vector.broadcast %cst_2 : f32 to vector<2x3x8xf32>
    %c0_3 = arith.constant 0 : index
    %c18 = arith.constant 18 : index
    %c0_4 = arith.constant 0 : index
    %3 = vector.load %arg6[%c0_3, %c18, %c0_4] : memref<2x21x8xf32, #tpu.memory_space<vmem>>, vector<2x3x8xf32>
    tpu.vector_store %arg6[%c0_3, %c18, %c0_4], %2 {strides = array<i32>} : memref<2x21x8xf32, #tpu.memory_space<vmem>>, vector<2x3x8xf32>,
    %c0_5 = arith.constant 0 : index
    %c0_6 = arith.constant 0 : index
    %c0_7 = arith.constant 0 : index
    %4 = vector.load %arg1[%c0_5, %c0_6, %c0_7] : memref<2x16x8xf32, #tpu.memory_space<vmem>>, vector<2x16x8xf32>
    %c0_8 = arith.constant 0 : index
    %c2 = arith.constant 2 : index
    %c0_9 = arith.constant 0 : index
    %5 = vector.load %arg6[%c0_8, %c2, %c0_9] : memref<2x21x8xf32, #tpu.memory_space<vmem>>, vector<2x16x8xf32>
    tpu.vector_store %arg6[%c0_8, %c2, %c0_9], %4 {strides = array<i32>} : memref<2x21x8xf32, #tpu.memory_space<vmem>>, vector<2x16x8xf32>,
    %c0_10 = arith.constant 0 : index
    %c0_11 = arith.constant 0 : index
    %c0_12 = arith.constant 0 : index
    %6 = vector.load %arg6[%c0_10, %c0_11, %c0_12] : memref<2x21x8xf32, #tpu.memory_space<vmem>>, vector<2x17x8xf32>
    %c0_13 = arith.constant 0 : index
    %c1 = arith.constant 1 : index
    %c0_14 = arith.constant 0 : index
    %7 = vector.load %arg6[%c0_13, %c1, %c0_14] : memref<2x21x8xf32, #tpu.memory_space<vmem>>, vector<2x17x8xf32>
    %c0_15 = arith.constant 0 : index
    %c2_16 = arith.constant 2 : index
    %c0_17 = arith.constant 0 : index
    %8 = vector.load %arg6[%c0_15, %c2_16, %c0_17] : memref<2x21x8xf32, #tpu.memory_space<vmem>>, vector<2x17x8xf32>
    %c0_18 = arith.constant 0 : index
    %c3 = arith.constant 3 : index
    %c0_19 = arith.constant 0 : index
    %9 = vector.load %arg6[%c0_18, %c3, %c0_19] : memref<2x21x8xf32, #tpu.memory_space<vmem>>, vector<2x17x8xf32>
    %c0_20 = arith.constant 0 : index
    %c4 = arith.constant 4 : index
    %c0_21 = arith.constant 0 : index
    %10 = vector.load %arg6[%c0_20, %c4, %c0_21] : memref<2x21x8xf32, #tpu.memory_space<vmem>>, vector<2x17x8xf32>
    %11 = tpu.concatenate %6, %7, %8, %9, %10 in 2 : vector<2x17x8xf32>, vector<2x17x8xf32>, vector<2x17x8xf32>, vector<2x17x8xf32>, vector<2x17x8xf32> -> vector<2x17x40xf32>
    %12 = vector.shape_cast %11 : vector<2x17x40xf32> to vector<34x40xf32>
    %c0_22 = arith.constant 0 : index
    %c0_23 = arith.constant 0 : index
    %13 = vector.load %arg2[%c0_22, %c0_23] : memref<40x48xf32, #tpu.memory_space<vmem>>, vector<40x48xf32>
    %cst_24 = arith.constant dense<0.000000e+00> : vector<34x48xf32>
    %14 = tpu.matmul %12, %13, %cst_24 {dimension_numbers = #tpu.dot_dimension_numbers<[1], [0], [0], [1], [0, 0, 1, 1], [], []>} : vector<34x40xf32>, vector<40x48xf32>, vector<34x48xf32> -> vector<34x48xf32>
    %15 = vector.shape_cast %14 : vector<34x48xf32> to vector<2x17x48xf32>
    %c0_25 = arith.constant 0 : index
    %c0_26 = arith.constant 0 : index
    %16 = vector.load %arg4[%c0_25, %c0_26] : memref<17x48xf32, #tpu.memory_space<vmem>>, vector<17x48xf32>
    %17 = vector.shape_cast %16 : vector<17x48xf32> to vector<1x17x48xf32>
    %18 = vector.broadcast %17 : vector<1x17x48xf32> to vector<2x17x48xf32>
    %19 = arith.addf %15, %18 : vector<2x17x48xf32>
    %cst_27 = arith.constant dense<0xFF800000> : vector<2x48xf32>
    %20 = vector.multi_reduction <maximumf>, %19, %cst_27 [1] : vector<2x17x48xf32> to vector<2x48xf32>
    %c0_28 = arith.constant 0 : index
    %c0_29 = arith.constant 0 : index
    %21 = vector.load %arg3[%c0_28, %c0_29] : memref<1x48xf32, #tpu.memory_space<vmem>>, vector<1x48xf32>
    %22 = vector.broadcast %21 : vector<1x48xf32> to vector<2x48xf32>
    %23 = arith.addf %20, %22 : vector<2x48xf32>
    %cst_30 = arith.constant 0.000000e+00 : f32
    %24 = vector.broadcast %cst_30 : f32 to vector<2x48xf32>
    %25 = arith.maximumf %23, %24 : vector<2x48xf32>
    %c0_31 = arith.constant 0 : index
    %c0_32 = arith.constant 0 : index
    %26 = vector.load %arg5[%c0_31, %c0_32] : memref<2x48xf32, #tpu.memory_space<vmem>>, vector<2x48xf32>
    tpu.vector_store %arg5[%c0_31, %c0_32], %25 {strides = array<i32>} : memref<2x48xf32, #tpu.memory_space<vmem>>, vector<2x48xf32>,
    return
  }
  func.func @transform_0(%arg0: i32) -> (i32, i32, i32) {
    %c0_i32 = arith.constant 0 : i32
    %c0_i32_0 = arith.constant 0 : i32
    %c0_i32_1 = arith.constant 0 : i32
    return %arg0, %c0_i32, %c0_i32_0 : i32, i32, i32
  }
  func.func @transform_1(%arg0: i32) -> (i32, i32) {
    %c0_i32 = arith.constant 0 : i32
    %c0_i32_0 = arith.constant 0 : i32
    %c0_i32_1 = arith.constant 0 : i32
    return %c0_i32, %c0_i32_0 : i32, i32
  }
  func.func @transform_2(%arg0: i32) -> (i32, i32) {
    %c0_i32 = arith.constant 0 : i32
    %c0_i32_0 = arith.constant 0 : i32
    %c0_i32_1 = arith.constant 0 : i32
    return %c0_i32, %c0_i32_0 : i32, i32
  }
  func.func @transform_3(%arg0: i32) -> (i32, i32) {
    %c0_i32 = arith.constant 0 : i32
    %c0_i32_0 = arith.constant 0 : i32
    %c0_i32_1 = arith.constant 0 : i32
    return %c0_i32, %c0_i32_0 : i32, i32
  }
  func.func @transform_4(%arg0: i32) -> (i32, i32) {
    %c0_i32 = arith.constant 0 : i32
    %c0_i32_0 = arith.constant 0 : i32
    return %arg0, %c0_i32 : i32, i32
  }
}

</mosaic_0001>

<llo_original>
// kernel: tpu_custom_call.1
$region0: #{tpu_custom_call.1}
  #allocation0 [shape = 'u32[]', space=smem, size = 0x4, offset = 0x4, fixed_abs, tag = 'smem constant byte address 0x4 - core index']
  #allocation1 [shape = 'u32[144,128]{1,0:T(1,128)}', space=vmem, size = 0x12000, scoped, tag = 'internal scratch']
  #allocation2 [shape = 'f32[2,21,8]{2,1,0:T(8,128)}', space=vmem, size = 0x6000, scoped, tag = 'scratch operand']
  %s0 = inlined_call_operand.vmem [shape: f32[2,16,8], index: 0, kind: input, shape index: {}]
  %s1 = inlined_call_operand.vmem [shape: f32[40,48], index: 1, kind: input, shape index: {}]
  %s2 = inlined_call_operand.vmem [shape: f32[1,48], index: 2, kind: input, shape index: {}]
  %s3 = inlined_call_operand.hbm [shape: f32[17,48], index: 3, kind: input, shape index: {}]
  %s4 = inlined_call_operand.hbm [shape: f32[2,48], index: 4, kind: output, shape index: {}]
  %s5 = sld [smem:[#allocation0]]
  $region30: #{tpu_custom_call.1} parent=0
    _
  %s7 = ssub.s32 1, %s5
  %s8 = scalar_select 0, %s7, %s5
  $region1: #{tpu_custom_call.1} parent=0
    #allocation3 [shape = 'u8[12288]{0}', space=vmem, size = 0x3000, scoped, tag = 'input window, operand 3, single buffered']
    #allocation4 [shape = 's32[1]{0}', space=sflag, size = 0x4, scoped, tag = 'scoped memory for tpu_custom_call.1']
    #allocation5 [shape = 's32[1]{0}', space=sflag, size = 0x4, scoped, tag = 'scoped memory for tpu_custom_call.1']
    #allocation6 [shape = 'u8[1024]{0}', space=vmem, size = 0x400, scoped, tag = 'output window, operand 0, single buffered']
    %9 = vsyncpa [#allocation4], 0
    %10 = vsyncpa [#allocation5], 0
    // Predicated region
    $region2: #{tpu_custom_call.1} parent=1 // pred_check
      _
    $region3: #{tpu_custom_call.1} parent=1 // pred_check_branch
      %12 = sbr.rel (0) target = $region5
    $region4: #{tpu_custom_call.1} parent=1 // pred_region
      _
    $region5: #{tpu_custom_call.1} parent=1 // pred_fallthru
      _
    // Predicated region
    $region6: #{tpu_custom_call.1} parent=1 // pred_check
      _
    $region7: #{tpu_custom_call.1} parent=1 // pred_check_branch
      %14 = sbr.rel (0) target = $region9
    $region8: #{tpu_custom_call.1} parent=1 // pred_region
      _
    $region9: #{tpu_custom_call.1} parent=1 // pred_fallthru
      _
    // Predicated region
    $region10: #{tpu_custom_call.1} parent=1 // pred_check
      _
    $region11: #{tpu_custom_call.1} parent=1 // pred_check_branch
      %16 = sbr.rel (0) target = $region13
    $region12: #{tpu_custom_call.1} parent=1 // pred_region
      _
    $region13: #{tpu_custom_call.1} parent=1 // pred_fallthru
      _
    // Predicated region
    $region14: #{tpu_custom_call.1} parent=1 // pred_check
      _
    $region15: #{tpu_custom_call.1} parent=1 // pred_check_branch
      %18 = sbr.rel (0) target = $region17
    $region16: #{tpu_custom_call.1} parent=1 // pred_region
      %s20 = ssub.s32 384, 384
      %21 = vsyncadd [#allocation4], %s20
      %s22 = sshll.u32 [#allocation3], 4
      %s23 = int_to_ptr.vmem [resolvable:$true] %s22
      %28 = dma.hbm_to_vmem [thread:$0]  %s3, 384, %s23, [#allocation4], 128, 128, 8
    $region17: #{tpu_custom_call.1} parent=1 // pred_fallthru
      _
    // Predicated region
    $region18: #{tpu_custom_call.1} parent=1 // pred_check
      _
    $region19: #{tpu_custom_call.1} parent=1 // pred_check_branch
      %30 = sbr.rel (0) target = $region21
    $region20: #{tpu_custom_call.1} parent=1 // pred_region
      %31 = dma.done [#allocation4], 384
    $region21: #{tpu_custom_call.1} parent=1 // pred_fallthru
      _
    %vm32 = vcmask 58368
    %33 = vst.msk [vmem:[#allocation2] sm:$0x3] %vm32, 0.0
    %34 = vst.msk [vmem:[#allocation2 + $0x18] sm:$0x3] %vm32, 0.0
    %vm35 = vcmask 59392
    %36 = vst.msk [vmem:[#allocation2 + $0x12] sm:$0x7] %vm35, 0.0
    %37 = vst.msk [vmem:[#allocation2 + $0x2a] sm:$0x7] %vm35, 0.0
    %v38 = vld [vmem:[%s0] sm:$0xff]
    %v39 = vld [vmem:[%s0 + $0x8] sm:$0xff]
    %v40 = vld [vmem:[%s0 + $0x10] sm:$0xff]
    %v41 = vld [vmem:[%s0 + $0x18] sm:$0xff]
    %vm42 = vcmask 64512
    %43 = vst.msk [vmem:[#allocation2 + $0x2] sm:$0xff] %vm42, %v38
    %44 = vst.msk [vmem:[#allocation2 + $0xa] sm:$0xff] %vm42, %v39
    %45 = vst.msk [vmem:[#allocation2 + $0x1a] sm:$0xff] %vm42, %v40
    %46 = vst.msk [vmem:[#allocation2 + $0x22] sm:$0xff] %vm42, %v41
    %v47 = vld [vmem:[#allocation2] sm:$0xff]
    %v48 = vld [vmem:[#allocation2 + $0x8] sm:$0xff]
    %v49 = vld [vmem:[#allocation2 + $0x10] sm:$0x1]
    %v50 = vld [vmem:[#allocation2 + $0x18] sm:$0xff]
    %v51 = vld [vmem:[#allocation2 + $0x20] sm:$0xff]
    %v52 = vld [vmem:[#allocation2 + $0x28] sm:$0x1]
    %v53 = vld [vmem:[#allocation2 + $0x1] sm:$0xff]
    %v54 = vld [vmem:[#allocation2 + $0x9] sm:$0xff]
    %v55 = vld [vmem:[#allocation2 + $0x11] sm:$0x1]
    %v56 = vld [vmem:[#allocation2 + $0x19] sm:$0xff]
    %v57 = vld [vmem:[#allocation2 + $0x21] sm:$0xff]
    %v58 = vld [vmem:[#allocation2 + $0x29] sm:$0x1]
    %v59 = vld [vmem:[#allocation2 + $0x2] sm:$0xff]
    %v60 = vld [vmem:[#allocation2 + $0xa] sm:$0xff]
    %v61 = vld [vmem:[#allocation2 + $0x12] sm:$0x1]
    %v62 = vld [vmem:[#allocation2 + $0x1a] sm:$0xff]
    %v63 = vld [vmem:[#allocation2 + $0x22] sm:$0xff]
    %v64 = vld [vmem:[#allocation2 + $0x2a] sm:$0x1]
    %v65 = vld [vmem:[#allocation2 + $0x3] sm:$0xff]
    %v66 = vld [vmem:[#allocation2 + $0xb] sm:$0xff]
    %v67 = vld [vmem:[#allocation2 + $0x13] sm:$0x1]
    %v68 = vld [vmem:[#allocation2 + $0x1b] sm:$0xff]
    %v69 = vld [vmem:[#allocation2 + $0x23] sm:$0xff]
    %v70 = vld [vmem:[#allocation2 + $0x2b] sm:$0x1]
    %v71 = vld [vmem:[#allocation2 + $0x4] sm:$0xff]
    %v72 = vld [vmem:[#allocation2 + $0xc] sm:$0xff]
    %v73 = vld [vmem:[#allocation2 + $0x14] sm:$0x1]
    %v74 = vld [vmem:[#allocation2 + $0x1c] sm:$0xff]
    %v75 = vld [vmem:[#allocation2 + $0x24] sm:$0xff]
    %v76 = vld [vmem:[#allocation2 + $0x2c] sm:$0x1]
    %83 = vrot.lane.b32.xlu0 %v53, 8
    %v84 = vpop.permute.xlu0 %83
    %85 = vrot.lane.b32.xlu0 %v54, 8
    %v86 = vpop.permute.xlu0 %85
    %87 = vrot.lane.b32.xlu0 %v55, 8
    %v88 = vpop.permute.xlu0 %87
    %89 = vrot.lane.b32.xlu0 %v56, 8
    %v90 = vpop.permute.xlu0 %89
    %91 = vrot.lane.b32.xlu0 %v57, 8
    %v92 = vpop.permute.xlu0 %91
    %93 = vrot.lane.b32.xlu0 %v58, 8
    %v94 = vpop.permute.xlu0 %93
    %107 = vrot.lane.b32.xlu0 %v59, 16
    %v108 = vpop.permute.xlu0 %107
    %109 = vrot.lane.b32.xlu0 %v60, 16
    %v110 = vpop.permute.xlu0 %109
    %111 = vrot.lane.b32.xlu0 %v61, 16
    %v112 = vpop.permute.xlu0 %111
    %113 = vrot.lane.b32.xlu0 %v62, 16
    %v114 = vpop.permute.xlu0 %113
    %115 = vrot.lane.b32.xlu0 %v63, 16
    %v116 = vpop.permute.xlu0 %115
    %117 = vrot.lane.b32.xlu0 %v64, 16
    %v118 = vpop.permute.xlu0 %117
    %131 = vrot.lane.b32.xlu0 %v65, 24
    %v132 = vpop.permute.xlu0 %131
    %133 = vrot.lane.b32.xlu0 %v66, 24
    %v134 = vpop.permute.xlu0 %133
    %135 = vrot.lane.b32.xlu0 %v67, 24
    %v136 = vpop.permute.xlu0 %135
    %137 = vrot.lane.b32.xlu0 %v68, 24
    %v138 = vpop.permute.xlu0 %137
    %139 = vrot.lane.b32.xlu0 %v69, 24
    %v140 = vpop.permute.xlu0 %139
    %141 = vrot.lane.b32.xlu0 %v70, 24
    %v142 = vpop.permute.xlu0 %141
    %155 = vrot.lane.b32.xlu0 %v71, 32
    %v156 = vpop.permute.xlu0 %155
    %157 = vrot.lane.b32.xlu0 %v72, 32
    %v158 = vpop.permute.xlu0 %157
    %159 = vrot.lane.b32.xlu0 %v73, 32
    %v160 = vpop.permute.xlu0 %159
    %161 = vrot.lane.b32.xlu0 %v74, 32
    %v162 = vpop.permute.xlu0 %161
    %163 = vrot.lane.b32.xlu0 %v75, 32
    %v164 = vpop.permute.xlu0 %163
    %165 = vrot.lane.b32.xlu0 %v76, 32
    %v166 = vpop.permute.xlu0 %165
    %v173 = vsel %vm42, %v47, %v84
    %v174 = vsel %vm42, %v48, %v86
    %v175 = vsel %vm42, %v49, %v88
    %v176 = vsel %vm42, %v50, %v90
    %v177 = vsel %vm42, %v51, %v92
    %v178 = vsel %vm42, %v52, %v94
    %vm179 = vcmask 130048
    %v180 = vsel %vm179, %v173, %v108
    %v181 = vsel %vm179, %v174, %v110
    %v182 = vsel %vm179, %v175, %v112
    %v183 = vsel %vm179, %v176, %v114
    %v184 = vsel %vm179, %v177, %v116
    %v185 = vsel %vm179, %v178, %v118
    %vm186 = vcmask 195584
    %v187 = vsel %vm186, %v180, %v132
    %v188 = vsel %vm186, %v181, %v134
    %v189 = vsel %vm186, %v182, %v136
    %v190 = vsel %vm186, %v183, %v138
    %v191 = vsel %vm186, %v184, %v140
    %v192 = vsel %vm186, %v185, %v142
    %vm193 = vcmask 261120
    %v194 = vsel %vm193, %v187, %v156
    %v195 = vsel %vm193, %v188, %v158
    %v196 = vsel %vm193, %v189, %v160
    %v197 = vsel %vm193, %v190, %v162
    %v198 = vsel %vm193, %v191, %v164
    %v199 = vsel %vm193, %v192, %v166
    %v206 = vcombine.high %v194, %v194
    %v208 = vunpack.c.l.s4 1966171168
    %v209 = vunpack.c.0.s8 %v208
    %v210 = vlaneseq
    %v211 = vshrl.u32 %v210, 7
    %v212 = vsub.s32 %v209, %v211
    %v213 = vrot.slane %v194, %v212
    %v215 = vunpack.c.l.s4 1966171168
    %v216 = vunpack.c.0.s8 %v215
    %v217 = vlaneseq
    %v218 = vshrl.u32 %v217, 7
    %v219 = vsub.s32 %v216, %v218
    %v220 = vrot.slane %v206, %v219
    %v221 = vcombine.high %v213, %v213
    %v222 = vcombine.high %v220, %v220
    %v224 = vunpack.c.l.s4 1966171168
    %v225 = vunpack.c.0.s8 %v224
    %v226 = vlaneseq
    %v227 = vshrl.u32 %v226, 7
    %v228 = vsub.s32 %v225, %v227
    %v229 = vrot.slane %v213, %v228
    %v231 = vunpack.c.l.s4 1966171168
    %v232 = vunpack.c.0.s8 %v231
    %v233 = vlaneseq
    %v234 = vshrl.u32 %v233, 7
    %v235 = vsub.s32 %v232, %v234
    %v236 = vrot.slane %v220, %v235
    %v238 = vunpack.c.l.s4 1966171168
    %v239 = vunpack.c.0.s8 %v238
    %v240 = vlaneseq
    %v241 = vshrl.u32 %v240, 7
    %v242 = vsub.s32 %v239, %v241
    %v243 = vrot.slane %v221, %v242
    %v245 = vunpack.c.l.s4 1966171168
    %v246 = vunpack.c.0.s8 %v245
    %v247 = vlaneseq
    %v248 = vshrl.u32 %v247, 7
    %v249 = vsub.s32 %v246, %v248
    %v250 = vrot.slane %v222, %v249
    %v251 = vcombine.high %v229, %v229
    %v252 = vcombine.high %v236, %v236
    %v253 = vcombine.high %v243, %v243
    %v254 = vcombine.high %v250, %v250
    %v255 = vcombine.high %v195, %v195
    %v257 = vunpack.c.l.s4 1966171168
    %v258 = vunpack.c.0.s8 %v257
    %v259 = vlaneseq
    %v260 = vshrl.u32 %v259, 7
    %v261 = vsub.s32 %v258, %v260
    %v262 = vrot.slane %v195, %v261
    %v264 = vunpack.c.l.s4 1966171168
    %v265 = vunpack.c.0.s8 %v264
    %v266 = vlaneseq
    %v267 = vshrl.u32 %v266, 7
    %v268 = vsub.s32 %v265, %v267
    %v269 = vrot.slane %v255, %v268
    %v270 = vcombine.high %v262, %v262
    %v271 = vcombine.high %v269, %v269
    %v273 = vunpack.c.l.s4 1966171168
    %v274 = vunpack.c.0.s8 %v273
    %v275 = vlaneseq
    %v276 = vshrl.u32 %v275, 7
    %v277 = vsub.s32 %v274, %v276
    %v278 = vrot.slane %v262, %v277
    %v280 = vunpack.c.l.s4 1966171168
    %v281 = vunpack.c.0.s8 %v280
    %v282 = vlaneseq
    %v283 = vshrl.u32 %v282, 7
    %v284 = vsub.s32 %v281, %v283
    %v285 = vrot.slane %v269, %v284
    %v287 = vunpack.c.l.s4 1966171168
    %v288 = vunpack.c.0.s8 %v287
    %v289 = vlaneseq
    %v290 = vshrl.u32 %v289, 7
    %v291 = vsub.s32 %v288, %v290
    %v292 = vrot.slane %v270, %v291
    %v294 = vunpack.c.l.s4 1966171168
    %v295 = vunpack.c.0.s8 %v294
    %v296 = vlaneseq
    %v297 = vshrl.u32 %v296, 7
    %v298 = vsub.s32 %v295, %v297
    %v299 = vrot.slane %v271, %v298
    %v300 = vcombine.high %v278, %v278
    %v301 = vcombine.high %v285, %v285
    %v302 = vcombine.high %v292, %v292
    %v303 = vcombine.high %v299, %v299
    %v305 = vunpack.c.l.s4 1966171168
    %v306 = vunpack.c.0.s8 %v305
    %v307 = vlaneseq
    %v308 = vshrl.u32 %v307, 7
    %v309 = vsub.s32 %v306, %v308
    %v310 = vrot.slane %v196, %v309
    %v312 = vunpack.c.l.s4 1966171168
    %v313 = vunpack.c.0.s8 %v312
    %v314 = vlaneseq
    %v315 = vshrl.u32 %v314, 7
    %v316 = vsub.s32 %v313, %v315
    %v317 = vrot.slane %v310, %v316
    %v318 = vcombine.high %v197, %v197
    %v320 = vunpack.c.l.s4 1966171168
    %v321 = vunpack.c.0.s8 %v320
    %v322 = vlaneseq
    %v323 = vshrl.u32 %v322, 7
    %v324 = vsub.s32 %v321, %v323
    %v325 = vrot.slane %v197, %v324
    %v327 = vunpack.c.l.s4 1966171168
    %v328 = vunpack.c.0.s8 %v327
    %v329 = vlaneseq
    %v330 = vshrl.u32 %v329, 7
    %v331 = vsub.s32 %v328, %v330
    %v332 = vrot.slane %v318, %v331
    %v333 = vcombine.high %v325, %v325
    %v334 = vcombine.high %v332, %v332
    %v336 = vunpack.c.l.s4 1966171168
    %v337 = vunpack.c.0.s8 %v336
    %v338 = vlaneseq
    %v339 = vshrl.u32 %v338, 7
    %v340 = vsub.s32 %v337, %v339
    %v341 = vrot.slane %v325, %v340
    %v343 = vunpack.c.l.s4 1966171168
    %v344 = vunpack.c.0.s8 %v343
    %v345 = vlaneseq
    %v346 = vshrl.u32 %v345, 7
    %v347 = vsub.s32 %v344, %v346
    %v348 = vrot.slane %v332, %v347
    %v350 = vunpack.c.l.s4 1966171168
    %v351 = vunpack.c.0.s8 %v350
    %v352 = vlaneseq
    %v353 = vshrl.u32 %v352, 7
    %v354 = vsub.s32 %v351, %v353
    %v355 = vrot.slane %v333, %v354
    %v357 = vunpack.c.l.s4 1966171168
    %v358 = vunpack.c.0.s8 %v357
    %v359 = vlaneseq
    %v360 = vshrl.u32 %v359, 7
    %v361 = vsub.s32 %v358, %v360
    %v362 = vrot.slane %v334, %v361
    %v363 = vcombine.high %v341, %v341
    %v364 = vcombine.high %v348, %v348
    %v365 = vcombine.high %v355, %v355
    %v366 = vcombine.high %v362, %v362
    %v367 = vcombine.high %v198, %v198
    %v369 = vunpack.c.l.s4 1966171168
    %v370 = vunpack.c.0.s8 %v369
    %v371 = vlaneseq
    %v372 = vshrl.u32 %v371, 7
    %v373 = vsub.s32 %v370, %v372
    %v374 = vrot.slane %v198, %v373
    %v376 = vunpack.c.l.s4 1966171168
    %v377 = vunpack.c.0.s8 %v376
    %v378 = vlaneseq
    %v379 = vshrl.u32 %v378, 7
    %v380 = vsub.s32 %v377, %v379
    %v381 = vrot.slane %v367, %v380
    %v382 = vcombine.high %v374, %v374
    %v383 = vcombine.high %v381, %v381
    %v385 = vunpack.c.l.s4 1966171168
    %v386 = vunpack.c.0.s8 %v385
    %v387 = vlaneseq
    %v388 = vshrl.u32 %v387, 7
    %v389 = vsub.s32 %v386, %v388
    %v390 = vrot.slane %v374, %v389
    %v392 = vunpack.c.l.s4 1966171168
    %v393 = vunpack.c.0.s8 %v392
    %v394 = vlaneseq
    %v395 = vshrl.u32 %v394, 7
    %v396 = vsub.s32 %v393, %v395
    %v397 = vrot.slane %v381, %v396
    %v399 = vunpack.c.l.s4 1966171168
    %v400 = vunpack.c.0.s8 %v399
    %v401 = vlaneseq
    %v402 = vshrl.u32 %v401, 7
    %v403 = vsub.s32 %v400, %v402
    %v404 = vrot.slane %v382, %v403
    %v406 = vunpack.c.l.s4 1966171168
    %v407 = vunpack.c.0.s8 %v406
    %v408 = vlaneseq
    %v409 = vshrl.u32 %v408, 7
    %v410 = vsub.s32 %v407, %v409
    %v411 = vrot.slane %v383, %v410
    %v412 = vcombine.high %v390, %v390
    %v413 = vcombine.high %v397, %v397
    %v414 = vcombine.high %v404, %v404
    %v415 = vcombine.high %v411, %v411
    %v417 = vunpack.c.l.s4 1966171168
    %v418 = vunpack.c.0.s8 %v417
    %v419 = vlaneseq
    %v420 = vshrl.u32 %v419, 7
    %v421 = vsub.s32 %v418, %v420
    %v422 = vrot.slane %v199, %v421
    %v424 = vunpack.c.l.s4 1966171168
    %v425 = vunpack.c.0.s8 %v424
    %v426 = vlaneseq
    %v427 = vshrl.u32 %v426, 7
    %v428 = vsub.s32 %v425, %v427
    %v429 = vrot.slane %v422, %v428
    %v430 = vld [vmem:[%s1] sm:$0xff]
    %v431 = vld [vmem:[%s1 + $0x8] sm:$0xff]
    %v432 = vld [vmem:[%s1 + $0x10] sm:$0xff]
    %v433 = vld [vmem:[%s1 + $0x18] sm:$0xff]
    %v434 = vld [vmem:[%s1 + $0x20] sm:$0xff]
    %v435 = vcombine.low %v229, %v243
    %v436 = vcombine.low %v251, %v253
    %v437 = vcombine.low %v236, %v250
    %v438 = vcombine.low %v252, %v254
    %v440 = vunpack.c.l.s4 1966171168
    %v441 = vunpack.c.0.s8 %v440
    %v442 = vlaneseq
    %v443 = vshrl.u32 %v442, 7
    %v444 = vsub.s32 %v441, %v443
    %v445 = vrot.slane %v435, %v444
    %v447 = vunpack.c.l.s4 1966171168
    %v448 = vunpack.c.0.s8 %v447
    %v449 = vlaneseq
    %v450 = vshrl.u32 %v449, 7
    %v451 = vsub.s32 %v448, %v450
    %v452 = vrot.slane %v436, %v451
    %v454 = vunpack.c.l.s4 1966171168
    %v455 = vunpack.c.0.s8 %v454
    %v456 = vlaneseq
    %v457 = vshrl.u32 %v456, 7
    %v458 = vsub.s32 %v455, %v457
    %v459 = vrot.slane %v437, %v458
    %v461 = vunpack.c.l.s4 1966171168
    %v462 = vunpack.c.0.s8 %v461
    %v463 = vlaneseq
    %v464 = vshrl.u32 %v463, 7
    %v465 = vsub.s32 %v462, %v464
    %v466 = vrot.slane %v438, %v465
    %v467 = vcombine.low %v445, %v452
    %v468 = vcombine.low %v459, %v466
    %v470 = vunpack.c.l.s4 1966171168
    %v471 = vunpack.c.0.s8 %v470
    %v472 = vlaneseq
    %v473 = vshrl.u32 %v472, 7
    %v474 = vsub.s32 %v471, %v473
    %v475 = vrot.slane %v467, %v474
    %v477 = vunpack.c.l.s4 1966171168
    %v478 = vunpack.c.0.s8 %v477
    %v479 = vlaneseq
    %v480 = vshrl.u32 %v479, 7
    %v481 = vsub.s32 %v478, %v480
    %v482 = vrot.slane %v468, %v481
    %v483 = vcombine.low %v475, %v482
    %v484 = vcombine.low %v278, %v292
    %v485 = vcombine.low %v300, %v302
    %v486 = vcombine.low %v285, %v299
    %v487 = vcombine.low %v301, %v303
    %v489 = vunpack.c.l.s4 1966171168
    %v490 = vunpack.c.0.s8 %v489
    %v491 = vlaneseq
    %v492 = vshrl.u32 %v491, 7
    %v493 = vsub.s32 %v490, %v492
    %v494 = vrot.slane %v484, %v493
    %v496 = vunpack.c.l.s4 1966171168
    %v497 = vunpack.c.0.s8 %v496
    %v498 = vlaneseq
    %v499 = vshrl.u32 %v498, 7
    %v500 = vsub.s32 %v497, %v499
    %v501 = vrot.slane %v485, %v500
    %v503 = vunpack.c.l.s4 1966171168
    %v504 = vunpack.c.0.s8 %v503
    %v505 = vlaneseq
    %v506 = vshrl.u32 %v505, 7
    %v507 = vsub.s32 %v504, %v506
    %v508 = vrot.slane %v486, %v507
    %v510 = vunpack.c.l.s4 1966171168
    %v511 = vunpack.c.0.s8 %v510
    %v512 = vlaneseq
    %v513 = vshrl.u32 %v512, 7
    %v514 = vsub.s32 %v511, %v513
    %v515 = vrot.slane %v487, %v514
    %v516 = vcombine.low %v494, %v501
    %v517 = vcombine.low %v508, %v515
    %v519 = vunpack.c.l.s4 1966171168
    %v520 = vunpack.c.0.s8 %v519
    %v521 = vlaneseq
    %v522 = vshrl.u32 %v521, 7
    %v523 = vsub.s32 %v520, %v522
    %v524 = vrot.slane %v516, %v523
    %v526 = vunpack.c.l.s4 1966171168
    %v527 = vunpack.c.0.s8 %v526
    %v528 = vlaneseq
    %v529 = vshrl.u32 %v528, 7
    %v530 = vsub.s32 %v527, %v529
    %v531 = vrot.slane %v517, %v530
    %v532 = vcombine.low %v524, %v531
    %v533 = vcombine.low %v317, %v341
    %v534 = vcombine.low %v355, %v363
    %v535 = vcombine.low %v365, %v348
    %v536 = vcombine.low %v362, %v364
    %v538 = vunpack.c.l.s4 1966171168
    %v539 = vunpack.c.0.s8 %v538
    %v540 = vlaneseq
    %v541 = vshrl.u32 %v540, 7
    %v542 = vsub.s32 %v539, %v541
    %v543 = vrot.slane %v533, %v542
    %v545 = vunpack.c.l.s4 1966171168
    %v546 = vunpack.c.0.s8 %v545
    %v547 = vlaneseq
    %v548 = vshrl.u32 %v547, 7
    %v549 = vsub.s32 %v546, %v548
    %v550 = vrot.slane %v534, %v549
    %v552 = vunpack.c.l.s4 1966171168
    %v553 = vunpack.c.0.s8 %v552
    %v554 = vlaneseq
    %v555 = vshrl.u32 %v554, 7
    %v556 = vsub.s32 %v553, %v555
    %v557 = vrot.slane %v535, %v556
    %v559 = vunpack.c.l.s4 1966171168
    %v560 = vunpack.c.0.s8 %v559
    %v561 = vlaneseq
    %v562 = vshrl.u32 %v561, 7
    %v563 = vsub.s32 %v560, %v562
    %v564 = vrot.slane %v536, %v563
    %v565 = vcombine.low %v543, %v550
    %v566 = vcombine.low %v557, %v564
    %v568 = vunpack.c.l.s4 1966171168
    %v569 = vunpack.c.0.s8 %v568
    %v570 = vlaneseq
    %v571 = vshrl.u32 %v570, 7
    %v572 = vsub.s32 %v569, %v571
    %v573 = vrot.slane %v565, %v572
    %v575 = vunpack.c.l.s4 1966171168
    %v576 = vunpack.c.0.s8 %v575
    %v577 = vlaneseq
    %v578 = vshrl.u32 %v577, 7
    %v579 = vsub.s32 %v576, %v578
    %v580 = vrot.slane %v566, %v579
    %v581 = vcombine.low %v573, %v580
    %v582 = vcombine.low %v366, %v390
    %v583 = vcombine.low %v404, %v412
    %v584 = vcombine.low %v414, %v397
    %v585 = vcombine.low %v411, %v413
    %v587 = vunpack.c.l.s4 1966171168
    %v588 = vunpack.c.0.s8 %v587
    %v589 = vlaneseq
    %v590 = vshrl.u32 %v589, 7
    %v591 = vsub.s32 %v588, %v590
    %v592 = vrot.slane %v582, %v591
    %v594 = vunpack.c.l.s4 1966171168
    %v595 = vunpack.c.0.s8 %v594
    %v596 = vlaneseq
    %v597 = vshrl.u32 %v596, 7
    %v598 = vsub.s32 %v595, %v597
    %v599 = vrot.slane %v583, %v598
    %v601 = vunpack.c.l.s4 1966171168
    %v602 = vunpack.c.0.s8 %v601
    %v603 = vlaneseq
    %v604 = vshrl.u32 %v603, 7
    %v605 = vsub.s32 %v602, %v604
    %v606 = vrot.slane %v584, %v605
    %v608 = vunpack.c.l.s4 1966171168
    %v609 = vunpack.c.0.s8 %v608
    %v610 = vlaneseq
    %v611 = vshrl.u32 %v610, 7
    %v612 = vsub.s32 %v609, %v611
    %v613 = vrot.slane %v585, %v612
    %v614 = vcombine.low %v592, %v599
    %v615 = vcombine.low %v606, %v613
    %v617 = vunpack.c.l.s4 1966171168
    %v618 = vunpack.c.0.s8 %v617
    %v619 = vlaneseq
    %v620 = vshrl.u32 %v619, 7
    %v621 = vsub.s32 %v618, %v620
    %v622 = vrot.slane %v614, %v621
    %v624 = vunpack.c.l.s4 1966171168
    %v625 = vunpack.c.0.s8 %v624
    %v626 = vlaneseq
    %v627 = vshrl.u32 %v626, 7
    %v628 = vsub.s32 %v625, %v627
    %v629 = vrot.slane %v615, %v628
    %v630 = vcombine.low %v622, %v629
    %v631 = vcombine.low %v415, %v429
    %v633 = vunpack.c.l.s4 1966171168
    %v634 = vunpack.c.0.s8 %v633
    %v635 = vlaneseq
    %v636 = vshrl.u32 %v635, 7
    %v637 = vsub.s32 %v634, %v636
    %v638 = vrot.slane %v631, %v637
    %v640 = vunpack.c.l.s4 1966171168
    %v641 = vunpack.c.0.s8 %v640
    %v642 = vlaneseq
    %v643 = vshrl.u32 %v642, 7
    %v644 = vsub.s32 %v641, %v643
    %v645 = vrot.slane %v638, %v644
    %vm646 = vcmask 326656
    %v647 = vsel %vm646, %v483, 0
    %v649 = vsel %vm646, %v532, 0
    %v651 = vsel %vm646, %v581, 0
    %v653 = vsel %vm646, %v630, 0
    %v655 = vsel %vm646, %v645, 0
    %657 = vmatprep.subr.mxu0 0.0
    %658 = vmatpush1.msra.mxu0 0.0
    %659 = vmatprep.subr.mxu0 0.0
    %660 = vmatpush1.msra.mxu0 0.0
    %661 = vmatprep.subr.mxu0 0.0
    %662 = vmatpush1.msra.mxu0 0.0
    %663 = vmatprep.subr.mxu0 0.0
    %664 = vmatpush1.msra.mxu0 0.0
    %665 = vmatprep.subr.mxu0 0.0
    %666 = vmatpush1.msra.mxu0 0.0
    %667 = vmatprep.subr.mxu0 0.0
    %668 = vmatpush1.msra.mxu0 0.0
    %669 = vmatprep.subr.mxu0 0.0
    %670 = vmatpush1.msra.mxu0 0.0
    %671 = vmatprep.subr.mxu0 0.0
    %672 = vmatpush1.msra.mxu0 0.0
    %673 = vmatprep.subr.mxu0 0.0
    %674 = vmatpush1.msra.mxu0 0.0
    %675 = vmatprep.subr.mxu0 0.0
    %676 = vmatpush1.msra.mxu0 0.0
    %677 = vmatprep.subr.mxu0 0.0
    %678 = vmatpush1.msra.mxu0 0.0
    %679 = vmatprep.subr.mxu0 0.0
    %680 = vmatpush1.msra.mxu0 %v434
    %681 = vmatprep.subr.mxu0 0.0
    %682 = vmatpush1.msra.mxu0 %v433
    %683 = vmatprep.subr.mxu0 0.0
    %684 = vmatpush1.msra.mxu0 %v432
    %685 = vmatprep.subr.mxu0 0.0
    %686 = vmatpush1.msra.mxu0 %v431
    %687 = vmatprep.subr.mxu0 0.0
    %688 = vmatpush1.msra.mxu0 %v430
    %689 = vmatprep.subr.mxu0 0.0
    %690 = vmatpush2.msra.mxu0 0.0
    %691 = vmatprep.subr.mxu0 0.0
    %692 = vmatpush2.msra.mxu0 0.0
    %693 = vmatprep.subr.mxu0 0.0
    %694 = vmatpush2.msra.mxu0 0.0
    %695 = vmatprep.subr.mxu0 0.0
    %696 = vmatpush2.msra.mxu0 0.0
    %697 = vmatprep.subr.mxu0 0.0
    %698 = vmatpush2.msra.mxu0 0.0
    %699 = vmatprep.subr.mxu0 0.0
    %700 = vmatpush2.msra.mxu0 0.0
    %701 = vmatprep.subr.mxu0 0.0
    %702 = vmatpush2.msra.mxu0 0.0
    %703 = vmatprep.subr.mxu0 0.0
    %704 = vmatpush2.msra.mxu0 0.0
    %705 = vmatprep.subr.mxu0 0.0
    %706 = vmatpush2.msra.mxu0 0.0
    %707 = vmatprep.subr.mxu0 0.0
    %708 = vmatpush2.msra.mxu0 0.0
    %709 = vmatprep.subr.mxu0 0.0
    %710 = vmatpush2.msra.mxu0 0.0
    %711 = vmatprep.subr.mxu0 0.0
    %712 = vmatpush2.msra.mxu0 0.0
    %713 = vmatprep.subr.mxu0 0.0
    %714 = vmatpush2.msra.mxu0 0.0
    %715 = vmatprep.subr.mxu0 0.0
    %716 = vmatpush2.msra.mxu0 0.0
    %717 = vmatprep.subr.mxu0 0.0
    %718 = vmatpush2.msra.mxu0 0.0
    %719 = vmatprep.subr.mxu0 0.0
    %720 = vmatpush2.msra.mxu0 0.0
    %721 = vmatprep.mubr.f32.mxu0 0.0
    %722 = vmatmul.mubr.f32.gmra.mxu0 %v647
    %v723 = vpop.f32.mrf.mxu0
    %v724 = vadd.f32 0.0, %v723
    %v725 = vpop.f32.mrf.mxu0
    %726 = vmatprep.mubr.f32.mxu0 0.0
    %727 = vmatmul.mubr.f32.gmra.mxu0 %v649
    %v728 = vpop.f32.mrf.mxu0
    %v729 = vadd.f32 0.0, %v728
    %v730 = vpop.f32.mrf.mxu0
    %731 = vmatprep.mubr.f32.mxu0 0.0
    %732 = vmatmul.mubr.f32.gmra.mxu0 %v651
    %v733 = vpop.f32.mrf.mxu0
    %v734 = vadd.f32 0.0, %v733
    %v735 = vpop.f32.mrf.mxu0
    %736 = vmatprep.mubr.f32.mxu0 0.0
    %737 = vmatmul.mubr.f32.gmra.mxu0 %v653
    %v738 = vpop.f32.mrf.mxu0
    %v739 = vadd.f32 0.0, %v738
    %v740 = vpop.f32.mrf.mxu0
    %741 = vmatprep.mubr.f32.mxu0 0.0
    %742 = vmatmul.mubr.f32.gmra.mxu0 %v655
    %v743 = vpop.f32.mrf.mxu0
    %v744 = vadd.f32 0.0, %v743
    %v745 = vpop.f32.mrf.mxu0
    %746 = vdwg.mxu0
    %v752 = vcombine.high %v724, %v724
    %v754 = vunpack.c.l.s4 1966171168
    %v755 = vunpack.c.0.s8 %v754
    %v756 = vlaneseq
    %v757 = vshrl.u32 %v756, 7
    %v758 = vsub.s32 %v755, %v757
    %v759 = vrot.slane %v724, %v758
    %v761 = vunpack.c.l.s4 1966171168
    %v762 = vunpack.c.0.s8 %v761
    %v763 = vlaneseq
    %v764 = vshrl.u32 %v763, 7
    %v765 = vsub.s32 %v762, %v764
    %v766 = vrot.slane %v752, %v765
    %v767 = vcombine.high %v759, %v759
    %v768 = vcombine.high %v766, %v766
    %v770 = vunpack.c.l.s4 1966171168
    %v771 = vunpack.c.0.s8 %v770
    %v772 = vlaneseq
    %v773 = vshrl.u32 %v772, 7
    %v774 = vsub.s32 %v771, %v773
    %v775 = vrot.slane %v759, %v774
    %v777 = vunpack.c.l.s4 1966171168
    %v778 = vunpack.c.0.s8 %v777
    %v779 = vlaneseq
    %v780 = vshrl.u32 %v779, 7
    %v781 = vsub.s32 %v778, %v780
    %v782 = vrot.slane %v766, %v781
    %v784 = vunpack.c.l.s4 1966171168
    %v785 = vunpack.c.0.s8 %v784
    %v786 = vlaneseq
    %v787 = vshrl.u32 %v786, 7
    %v788 = vsub.s32 %v785, %v787
    %v789 = vrot.slane %v767, %v788
    %v791 = vunpack.c.l.s4 1966171168
    %v792 = vunpack.c.0.s8 %v791
    %v793 = vlaneseq
    %v794 = vshrl.u32 %v793, 7
    %v795 = vsub.s32 %v792, %v794
    %v796 = vrot.slane %v768, %v795
    %v797 = vcombine.high %v775, %v775
    %v798 = vcombine.high %v782, %v782
    %v799 = vcombine.high %v789, %v789
    %v800 = vcombine.high %v796, %v796
    %v801 = vcombine.high %v729, %v729
    %v803 = vunpack.c.l.s4 1966171168
    %v804 = vunpack.c.0.s8 %v803
    %v805 = vlaneseq
    %v806 = vshrl.u32 %v805, 7
    %v807 = vsub.s32 %v804, %v806
    %v808 = vrot.slane %v729, %v807
    %v810 = vunpack.c.l.s4 1966171168
    %v811 = vunpack.c.0.s8 %v810
    %v812 = vlaneseq
    %v813 = vshrl.u32 %v812, 7
    %v814 = vsub.s32 %v811, %v813
    %v815 = vrot.slane %v801, %v814
    %v816 = vcombine.high %v808, %v808
    %v817 = vcombine.high %v815, %v815
    %v819 = vunpack.c.l.s4 1966171168
    %v820 = vunpack.c.0.s8 %v819
    %v821 = vlaneseq
    %v822 = vshrl.u32 %v821, 7
    %v823 = vsub.s32 %v820, %v822
    %v824 = vrot.slane %v808, %v823
    %v826 = vunpack.c.l.s4 1966171168
    %v827 = vunpack.c.0.s8 %v826
    %v828 = vlaneseq
    %v829 = vshrl.u32 %v828, 7
    %v830 = vsub.s32 %v827, %v829
    %v831 = vrot.slane %v815, %v830
    %v833 = vunpack.c.l.s4 1966171168
    %v834 = vunpack.c.0.s8 %v833
    %v835 = vlaneseq
    %v836 = vshrl.u32 %v835, 7
    %v837 = vsub.s32 %v834, %v836
    %v838 = vrot.slane %v816, %v837
    %v840 = vunpack.c.l.s4 1966171168
    %v841 = vunpack.c.0.s8 %v840
    %v842 = vlaneseq
    %v843 = vshrl.u32 %v842, 7
    %v844 = vsub.s32 %v841, %v843
    %v845 = vrot.slane %v817, %v844
    %v846 = vcombine.high %v824, %v824
    %v847 = vcombine.high %v831, %v831
    %v848 = vcombine.high %v838, %v838
    %v849 = vcombine.high %v845, %v845
    %v850 = vcombine.high %v734, %v734
    %v852 = vunpack.c.l.s4 1966171168
    %v853 = vunpack.c.0.s8 %v852
    %v854 = vlaneseq
    %v855 = vshrl.u32 %v854, 7
    %v856 = vsub.s32 %v853, %v855
    %v857 = vrot.slane %v734, %v856
    %v859 = vunpack.c.l.s4 1966171168
    %v860 = vunpack.c.0.s8 %v859
    %v861 = vlaneseq
    %v862 = vshrl.u32 %v861, 7
    %v863 = vsub.s32 %v860, %v862
    %v864 = vrot.slane %v850, %v863
    %v865 = vcombine.high %v857, %v857
    %v866 = vcombine.high %v864, %v864
    %v868 = vunpack.c.l.s4 1966171168
    %v869 = vunpack.c.0.s8 %v868
    %v870 = vlaneseq
    %v871 = vshrl.u32 %v870, 7
    %v872 = vsub.s32 %v869, %v871
    %v873 = vrot.slane %v857, %v872
    %v875 = vunpack.c.l.s4 1966171168
    %v876 = vunpack.c.0.s8 %v875
    %v877 = vlaneseq
    %v878 = vshrl.u32 %v877, 7
    %v879 = vsub.s32 %v876, %v878
    %v880 = vrot.slane %v864, %v879
    %v882 = vunpack.c.l.s4 1966171168
    %v883 = vunpack.c.0.s8 %v882
    %v884 = vlaneseq
    %v885 = vshrl.u32 %v884, 7
    %v886 = vsub.s32 %v883, %v885
    %v887 = vrot.slane %v865, %v886
    %v889 = vunpack.c.l.s4 1966171168
    %v890 = vunpack.c.0.s8 %v889
    %v891 = vlaneseq
    %v892 = vshrl.u32 %v891, 7
    %v893 = vsub.s32 %v890, %v892
    %v894 = vrot.slane %v866, %v893
    %v895 = vcombine.high %v873, %v873
    %v896 = vcombine.high %v880, %v880
    %v897 = vcombine.high %v887, %v887
    %v898 = vcombine.high %v894, %v894
    %v899 = vcombine.high %v739, %v739
    %v901 = vunpack.c.l.s4 1966171168
    %v902 = vunpack.c.0.s8 %v901
    %v903 = vlaneseq
    %v904 = vshrl.u32 %v903, 7
    %v905 = vsub.s32 %v902, %v904
    %v906 = vrot.slane %v739, %v905
    %v908 = vunpack.c.l.s4 1966171168
    %v909 = vunpack.c.0.s8 %v908
    %v910 = vlaneseq
    %v911 = vshrl.u32 %v910, 7
    %v912 = vsub.s32 %v909, %v911
    %v913 = vrot.slane %v899, %v912
    %v914 = vcombine.high %v906, %v906
    %v915 = vcombine.high %v913, %v913
    %v917 = vunpack.c.l.s4 1966171168
    %v918 = vunpack.c.0.s8 %v917
    %v919 = vlaneseq
    %v920 = vshrl.u32 %v919, 7
    %v921 = vsub.s32 %v918, %v920
    %v922 = vrot.slane %v906, %v921
    %v924 = vunpack.c.l.s4 1966171168
    %v925 = vunpack.c.0.s8 %v924
    %v926 = vlaneseq
    %v927 = vshrl.u32 %v926, 7
    %v928 = vsub.s32 %v925, %v927
    %v929 = vrot.slane %v913, %v928
    %v931 = vunpack.c.l.s4 1966171168
    %v932 = vunpack.c.0.s8 %v931
    %v933 = vlaneseq
    %v934 = vshrl.u32 %v933, 7
    %v935 = vsub.s32 %v932, %v934
    %v936 = vrot.slane %v914, %v935
    %v938 = vunpack.c.l.s4 1966171168
    %v939 = vunpack.c.0.s8 %v938
    %v940 = vlaneseq
    %v941 = vshrl.u32 %v940, 7
    %v942 = vsub.s32 %v939, %v941
    %v943 = vrot.slane %v915, %v942
    %v944 = vcombine.high %v922, %v922
    %v945 = vcombine.high %v929, %v929
    %v946 = vcombine.high %v936, %v936
    %v947 = vcombine.high %v943, %v943
    %v949 = vunpack.c.l.s4 1966171168
    %v950 = vunpack.c.0.s8 %v949
    %v951 = vlaneseq
    %v952 = vshrl.u32 %v951, 7
    %v953 = vsub.s32 %v950, %v952
    %v954 = vrot.slane %v744, %v953
    %v955 = vcombine.high %v954, %v954
    %v957 = vunpack.c.l.s4 1966171168
    %v958 = vunpack.c.0.s8 %v957
    %v959 = vlaneseq
    %v960 = vshrl.u32 %v959, 7
    %v961 = vsub.s32 %v958, %v960
    %v962 = vrot.slane %v954, %v961
    %v964 = vunpack.c.l.s4 1966171168
    %v965 = vunpack.c.0.s8 %v964
    %v966 = vlaneseq
    %v967 = vshrl.u32 %v966, 7
    %v968 = vsub.s32 %v965, %v967
    %v969 = vrot.slane %v955, %v968
    %v1004 = vld [vmem:[#allocation3] sm:$0xff]
    %v1005 = vld [vmem:[#allocation3 + $0x8] sm:$0xff]
    %v1006 = vld [vmem:[#allocation3 + $0x10] sm:$0x1]
    %v1010 = vcombine.high %v1004, %v1004
    %v1012 = vunpack.c.l.s4 1966171168
    %v1013 = vunpack.c.0.s8 %v1012
    %v1014 = vlaneseq
    %v1015 = vshrl.u32 %v1014, 7
    %v1016 = vsub.s32 %v1013, %v1015
    %v1017 = vrot.slane %v1004, %v1016
    %v1019 = vunpack.c.l.s4 1966171168
    %v1020 = vunpack.c.0.s8 %v1019
    %v1021 = vlaneseq
    %v1022 = vshrl.u32 %v1021, 7
    %v1023 = vsub.s32 %v1020, %v1022
    %v1024 = vrot.slane %v1010, %v1023
    %v1025 = vcombine.high %v1017, %v1017
    %v1026 = vcombine.high %v1024, %v1024
    %v1028 = vunpack.c.l.s4 1966171168
    %v1029 = vunpack.c.0.s8 %v1028
    %v1030 = vlaneseq
    %v1031 = vshrl.u32 %v1030, 7
    %v1032 = vsub.s32 %v1029, %v1031
    %v1033 = vrot.slane %v1017, %v1032
    %v1035 = vunpack.c.l.s4 1966171168
    %v1036 = vunpack.c.0.s8 %v1035
    %v1037 = vlaneseq
    %v1038 = vshrl.u32 %v1037, 7
    %v1039 = vsub.s32 %v1036, %v1038
    %v1040 = vrot.slane %v1024, %v1039
    %v1042 = vunpack.c.l.s4 1966171168
    %v1043 = vunpack.c.0.s8 %v1042
    %v1044 = vlaneseq
    %v1045 = vshrl.u32 %v1044, 7
    %v1046 = vsub.s32 %v1043, %v1045
    %v1047 = vrot.slane %v1025, %v1046
    %v1049 = vunpack.c.l.s4 1966171168
    %v1050 = vunpack.c.0.s8 %v1049
    %v1051 = vlaneseq
    %v1052 = vshrl.u32 %v1051, 7
    %v1053 = vsub.s32 %v1050, %v1052
    %v1054 = vrot.slane %v1026, %v1053
    %v1055 = vcombine.high %v1033, %v1033
    %v1056 = vcombine.high %v1040, %v1040
    %v1057 = vcombine.high %v1047, %v1047
    %v1058 = vcombine.high %v1054, %v1054
    %v1059 = vcombine.high %v1005, %v1005
    %v1061 = vunpack.c.l.s4 1966171168
    %v1062 = vunpack.c.0.s8 %v1061
    %v1063 = vlaneseq
    %v1064 = vshrl.u32 %v1063, 7
    %v1065 = vsub.s32 %v1062, %v1064
    %v1066 = vrot.slane %v1005, %v1065
    %v1068 = vunpack.c.l.s4 1966171168
    %v1069 = vunpack.c.0.s8 %v1068
    %v1070 = vlaneseq
    %v1071 = vshrl.u32 %v1070, 7
    %v1072 = vsub.s32 %v1069, %v1071
    %v1073 = vrot.slane %v1059, %v1072
    %v1074 = vcombine.high %v1066, %v1066
    %v1075 = vcombine.high %v1073, %v1073
    %v1077 = vunpack.c.l.s4 1966171168
    %v1078 = vunpack.c.0.s8 %v1077
    %v1079 = vlaneseq
    %v1080 = vshrl.u32 %v1079, 7
    %v1081 = vsub.s32 %v1078, %v1080
    %v1082 = vrot.slane %v1066, %v1081
    %v1084 = vunpack.c.l.s4 1966171168
    %v1085 = vunpack.c.0.s8 %v1084
    %v1086 = vlaneseq
    %v1087 = vshrl.u32 %v1086, 7
    %v1088 = vsub.s32 %v1085, %v1087
    %v1089 = vrot.slane %v1073, %v1088
    %v1091 = vunpack.c.l.s4 1966171168
    %v1092 = vunpack.c.0.s8 %v1091
    %v1093 = vlaneseq
    %v1094 = vshrl.u32 %v1093, 7
    %v1095 = vsub.s32 %v1092, %v1094
    %v1096 = vrot.slane %v1074, %v1095
    %v1098 = vunpack.c.l.s4 1966171168
    %v1099 = vunpack.c.0.s8 %v1098
    %v1100 = vlaneseq
    %v1101 = vshrl.u32 %v1100, 7
    %v1102 = vsub.s32 %v1099, %v1101
    %v1103 = vrot.slane %v1075, %v1102
    %v1104 = vcombine.high %v1082, %v1082
    %v1105 = vcombine.high %v1089, %v1089
    %v1106 = vcombine.high %v1096, %v1096
    %v1107 = vcombine.high %v1103, %v1103
    %v1109 = vunpack.c.l.s4 1966171168
    %v1110 = vunpack.c.0.s8 %v1109
    %v1111 = vlaneseq
    %v1112 = vshrl.u32 %v1111, 7
    %v1113 = vsub.s32 %v1110, %v1112
    %v1114 = vrot.slane %v1006, %v1113
    %v1116 = vunpack.c.l.s4 1966171168
    %v1117 = vunpack.c.0.s8 %v1116
    %v1118 = vlaneseq
    %v1119 = vshrl.u32 %v1118, 7
    %v1120 = vsub.s32 %v1117, %v1119
    %v1121 = vrot.slane %v1114, %v1120
    %v1139 = vadd.f32 %v775, %v1033
    %v1140 = vadd.f32 %v789, %v1047
    %v1141 = vadd.f32 %v797, %v1055
    %v1142 = vadd.f32 %v799, %v1057
    %v1143 = vadd.f32 %v782, %v1040
    %v1144 = vadd.f32 %v796, %v1054
    %v1145 = vadd.f32 %v798, %v1056
    %v1146 = vadd.f32 %v800, %v1058
    %v1147 = vadd.f32 %v824, %v1082
    %v1148 = vadd.f32 %v838, %v1096
    %v1149 = vadd.f32 %v846, %v1104
    %v1150 = vadd.f32 %v848, %v1106
    %v1151 = vadd.f32 %v831, %v1089
    %v1152 = vadd.f32 %v845, %v1103
    %v1153 = vadd.f32 %v847, %v1105
    %v1154 = vadd.f32 %v849, %v1107
    %v1155 = vadd.f32 %v873, %v1121
    %v1156 = vadd.f32 %v887, %v1033
    %v1157 = vadd.f32 %v895, %v1047
    %v1158 = vadd.f32 %v897, %v1055
    %v1159 = vadd.f32 %v880, %v1057
    %v1160 = vadd.f32 %v894, %v1040
    %v1161 = vadd.f32 %v896, %v1054
    %v1162 = vadd.f32 %v898, %v1056
    %v1163 = vadd.f32 %v922, %v1058
    %v1164 = vadd.f32 %v936, %v1082
    %v1165 = vadd.f32 %v944, %v1096
    %v1166 = vadd.f32 %v946, %v1104
    %v1167 = vadd.f32 %v929, %v1106
    %v1168 = vadd.f32 %v943, %v1089
    %v1169 = vadd.f32 %v945, %v1103
    %v1170 = vadd.f32 %v947, %v1105
    %v1171 = vadd.f32 %v962, %v1107
    %v1172 = vadd.f32 %v969, %v1121
    %v1207 = vcombine.low %v1139, %v1140
    %v1208 = vcombine.low %v1141, %v1142
    %v1209 = vcombine.low %v1143, %v1144
    %v1210 = vcombine.low %v1145, %v1146
    %v1212 = vunpack.c.l.s4 1966171168
    %v1213 = vunpack.c.0.s8 %v1212
    %v1214 = vlaneseq
    %v1215 = vshrl.u32 %v1214, 7
    %v1216 = vsub.s32 %v1213, %v1215
    %v1217 = vrot.slane %v1207, %v1216
    %v1219 = vunpack.c.l.s4 1966171168
    %v1220 = vunpack.c.0.s8 %v1219
    %v1221 = vlaneseq
    %v1222 = vshrl.u32 %v1221, 7
    %v1223 = vsub.s32 %v1220, %v1222
    %v1224 = vrot.slane %v1208, %v1223
    %v1226 = vunpack.c.l.s4 1966171168
    %v1227 = vunpack.c.0.s8 %v1226
    %v1228 = vlaneseq
    %v1229 = vshrl.u32 %v1228, 7
    %v1230 = vsub.s32 %v1227, %v1229
    %v1231 = vrot.slane %v1209, %v1230
    %v1233 = vunpack.c.l.s4 1966171168
    %v1234 = vunpack.c.0.s8 %v1233
    %v1235 = vlaneseq
    %v1236 = vshrl.u32 %v1235, 7
    %v1237 = vsub.s32 %v1234, %v1236
    %v1238 = vrot.slane %v1210, %v1237
    %v1239 = vcombine.low %v1217, %v1224
    %v1240 = vcombine.low %v1231, %v1238
    %v1242 = vunpack.c.l.s4 1966171168
    %v1243 = vunpack.c.0.s8 %v1242
    %v1244 = vlaneseq
    %v1245 = vshrl.u32 %v1244, 7
    %v1246 = vsub.s32 %v1243, %v1245
    %v1247 = vrot.slane %v1239, %v1246
    %v1249 = vunpack.c.l.s4 1966171168
    %v1250 = vunpack.c.0.s8 %v1249
    %v1251 = vlaneseq
    %v1252 = vshrl.u32 %v1251, 7
    %v1253 = vsub.s32 %v1250, %v1252
    %v1254 = vrot.slane %v1240, %v1253
    %v1255 = vcombine.low %v1247, %v1254
    %v1256 = vcombine.low %v1147, %v1148
    %v1257 = vcombine.low %v1149, %v1150
    %v1258 = vcombine.low %v1151, %v1152
    %v1259 = vcombine.low %v1153, %v1154
    %v1261 = vunpack.c.l.s4 1966171168
    %v1262 = vunpack.c.0.s8 %v1261
    %v1263 = vlaneseq
    %v1264 = vshrl.u32 %v1263, 7
    %v1265 = vsub.s32 %v1262, %v1264
    %v1266 = vrot.slane %v1256, %v1265
    %v1268 = vunpack.c.l.s4 1966171168
    %v1269 = vunpack.c.0.s8 %v1268
    %v1270 = vlaneseq
    %v1271 = vshrl.u32 %v1270, 7
    %v1272 = vsub.s32 %v1269, %v1271
    %v1273 = vrot.slane %v1257, %v1272
    %v1275 = vunpack.c.l.s4 1966171168
    %v1276 = vunpack.c.0.s8 %v1275
    %v1277 = vlaneseq
    %v1278 = vshrl.u32 %v1277, 7
    %v1279 = vsub.s32 %v1276, %v1278
    %v1280 = vrot.slane %v1258, %v1279
    %v1282 = vunpack.c.l.s4 1966171168
    %v1283 = vunpack.c.0.s8 %v1282
    %v1284 = vlaneseq
    %v1285 = vshrl.u32 %v1284, 7
    %v1286 = vsub.s32 %v1283, %v1285
    %v1287 = vrot.slane %v1259, %v1286
    %v1288 = vcombine.low %v1266, %v1273
    %v1289 = vcombine.low %v1280, %v1287
    %v1291 = vunpack.c.l.s4 1966171168
    %v1292 = vunpack.c.0.s8 %v1291
    %v1293 = vlaneseq
    %v1294 = vshrl.u32 %v1293, 7
    %v1295 = vsub.s32 %v1292, %v1294
    %v1296 = vrot.slane %v1288, %v1295
    %v1298 = vunpack.c.l.s4 1966171168
    %v1299 = vunpack.c.0.s8 %v1298
    %v1300 = vlaneseq
    %v1301 = vshrl.u32 %v1300, 7
    %v1302 = vsub.s32 %v1299, %v1301
    %v1303 = vrot.slane %v1289, %v1302
    %v1304 = vcombine.low %v1296, %v1303
    %v1306 = vunpack.c.l.s4 1966171168
    %v1307 = vunpack.c.0.s8 %v1306
    %v1308 = vlaneseq
    %v1309 = vshrl.u32 %v1308, 7
    %v1310 = vsub.s32 %v1307, %v1309
    %v1311 = vrot.slane %v1155, %v1310
    %v1313 = vunpack.c.l.s4 1966171168
    %v1314 = vunpack.c.0.s8 %v1313
    %v1315 = vlaneseq
    %v1316 = vshrl.u32 %v1315, 7
    %v1317 = vsub.s32 %v1314, %v1316
    %v1318 = vrot.slane %v1311, %v1317
    %v1319 = vcombine.low %v1156, %v1157
    %v1320 = vcombine.low %v1158, %v1159
    %v1321 = vcombine.low %v1160, %v1161
    %v1322 = vcombine.low %v1162, %v1163
    %v1324 = vunpack.c.l.s4 1966171168
    %v1325 = vunpack.c.0.s8 %v1324
    %v1326 = vlaneseq
    %v1327 = vshrl.u32 %v1326, 7
    %v1328 = vsub.s32 %v1325, %v1327
    %v1329 = vrot.slane %v1319, %v1328
    %v1331 = vunpack.c.l.s4 1966171168
    %v1332 = vunpack.c.0.s8 %v1331
    %v1333 = vlaneseq
    %v1334 = vshrl.u32 %v1333, 7
    %v1335 = vsub.s32 %v1332, %v1334
    %v1336 = vrot.slane %v1320, %v1335
    %v1338 = vunpack.c.l.s4 1966171168
    %v1339 = vunpack.c.0.s8 %v1338
    %v1340 = vlaneseq
    %v1341 = vshrl.u32 %v1340, 7
    %v1342 = vsub.s32 %v1339, %v1341
    %v1343 = vrot.slane %v1321, %v1342
    %v1345 = vunpack.c.l.s4 1966171168
    %v1346 = vunpack.c.0.s8 %v1345
    %v1347 = vlaneseq
    %v1348 = vshrl.u32 %v1347, 7
    %v1349 = vsub.s32 %v1346, %v1348
    %v1350 = vrot.slane %v1322, %v1349
    %v1351 = vcombine.low %v1329, %v1336
    %v1352 = vcombine.low %v1343, %v1350
    %v1354 = vunpack.c.l.s4 1966171168
    %v1355 = vunpack.c.0.s8 %v1354
    %v1356 = vlaneseq
    %v1357 = vshrl.u32 %v1356, 7
    %v1358 = vsub.s32 %v1355, %v1357
    %v1359 = vrot.slane %v1351, %v1358
    %v1361 = vunpack.c.l.s4 1966171168
    %v1362 = vunpack.c.0.s8 %v1361
    %v1363 = vlaneseq
    %v1364 = vshrl.u32 %v1363, 7
    %v1365 = vsub.s32 %v1362, %v1364
    %v1366 = vrot.slane %v1352, %v1365
    %v1367 = vcombine.low %v1359, %v1366
    %v1368 = vcombine.low %v1164, %v1165
    %v1369 = vcombine.low %v1166, %v1167
    %v1370 = vcombine.low %v1168, %v1169
    %v1371 = vcombine.low %v1170, %v1171
    %v1373 = vunpack.c.l.s4 1966171168
    %v1374 = vunpack.c.0.s8 %v1373
    %v1375 = vlaneseq
    %v1376 = vshrl.u32 %v1375, 7
    %v1377 = vsub.s32 %v1374, %v1376
    %v1378 = vrot.slane %v1368, %v1377
    %v1380 = vunpack.c.l.s4 1966171168
    %v1381 = vunpack.c.0.s8 %v1380
    %v1382 = vlaneseq
    %v1383 = vshrl.u32 %v1382, 7
    %v1384 = vsub.s32 %v1381, %v1383
    %v1385 = vrot.slane %v1369, %v1384
    %v1387 = vunpack.c.l.s4 1966171168
    %v1388 = vunpack.c.0.s8 %v1387
    %v1389 = vlaneseq
    %v1390 = vshrl.u32 %v1389, 7
    %v1391 = vsub.s32 %v1388, %v1390
    %v1392 = vrot.slane %v1370, %v1391
    %v1394 = vunpack.c.l.s4 1966171168
    %v1395 = vunpack.c.0.s8 %v1394
    %v1396 = vlaneseq
    %v1397 = vshrl.u32 %v1396, 7
    %v1398 = vsub.s32 %v1395, %v1397
    %v1399 = vrot.slane %v1371, %v1398
    %v1400 = vcombine.low %v1378, %v1385
    %v1401 = vcombine.low %v1392, %v1399
    %v1403 = vunpack.c.l.s4 1966171168
    %v1404 = vunpack.c.0.s8 %v1403
    %v1405 = vlaneseq
    %v1406 = vshrl.u32 %v1405, 7
    %v1407 = vsub.s32 %v1404, %v1406
    %v1408 = vrot.slane %v1400, %v1407
    %v1410 = vunpack.c.l.s4 1966171168
    %v1411 = vunpack.c.0.s8 %v1410
    %v1412 = vlaneseq
    %v1413 = vshrl.u32 %v1412, 7
    %v1414 = vsub.s32 %v1411, %v1413
    %v1415 = vrot.slane %v1401, %v1414
    %v1416 = vcombine.low %v1408, %v1415
    %v1418 = vunpack.c.l.s4 1966171168
    %v1419 = vunpack.c.0.s8 %v1418
    %v1420 = vlaneseq
    %v1421 = vshrl.u32 %v1420, 7
    %v1422 = vsub.s32 %v1419, %v1421
    %v1423 = vrot.slane %v1172, %v1422
    %v1425 = vunpack.c.l.s4 1966171168
    %v1426 = vunpack.c.0.s8 %v1425
    %v1427 = vlaneseq
    %v1428 = vshrl.u32 %v1427, 7
    %v1429 = vsub.s32 %v1426, %v1428
    %v1430 = vrot.slane %v1423, %v1429
    %vm1437 = vcmask 392192
    %v1438 = vsel %vm1437, %v1255, -inf
    %v1439 = vsel %vm1437, %v1304, -inf
    %vm1440 = vcmask 385024
    %v1441 = vsel %vm1440, %v1318, -inf
    %v1442 = vmax.f32 %v1438, %v1441
    %v1443 = vmax.f32 %v1442, %v1439
    %v1444 = vrot.slane %v1443, 4
    %v1445 = vmax.f32 %v1443, %v1444
    %v1446 = vrot.slane %v1445, 2
    %v1447 = vmax.f32 %v1445, %v1446
    %v1448 = vrot.slane %v1447, 1
    %v1449 = vmax.f32 %v1447, %v1448
    %v1450 = vsel %vm1437, %v1367, -inf
    %v1451 = vsel %vm1437, %v1416, -inf
    %v1452 = vsel %vm1440, %v1430, -inf
    %v1453 = vmax.f32 %v1450, %v1452
    %v1454 = vmax.f32 %v1453, %v1451
    %v1455 = vrot.slane %v1454, 4
    %v1456 = vmax.f32 %v1454, %v1455
    %v1457 = vrot.slane %v1456, 2
    %v1458 = vmax.f32 %v1456, %v1457
    %v1459 = vrot.slane %v1458, 1
    %v1460 = vmax.f32 %v1458, %v1459
    %v1461 = vld [vmem:[%s2] sm:$0x1]
    %v1463 = vlaneseq
    %v1464 = vshrl.u32 %v1463, 7
    %v1465 = vsub.s32 0, %v1464
    %v1466 = vrot.slane %v1461, %v1465
    %v1468 = vadd.f32 %v1449, %v1466
    %v1469 = vadd.f32 %v1460, %v1466
    %v1470 = vmax.f32 %v1468, 0.0
    %v1471 = vmax.f32 %v1469, 0.0
    %v1474 = vrot.slane %v1471, 7
    %vm1475 = vcmask 1041409
    %v1476 = vsel %vm1475, %v1474, %v1470
    %vm1478 = vcmask 386048
    %1479 = vst.msk [vmem:[#allocation6] sm:$0x3] %vm1478, %v1476
    // Predicated region
    $region22: #{tpu_custom_call.1} parent=1 // pred_check
      _
    $region23: #{tpu_custom_call.1} parent=1 // pred_check_branch
      %1481 = sbr.rel (0) target = $region25
    $region24: #{tpu_custom_call.1} parent=1 // pred_region
      %s1483 = ssub.s32 32, 32
      %1484 = vsyncadd [#allocation5], %s1483
      %s1486 = sshll.u32 [#allocation6], 4
      %s1487 = int_to_ptr.vmem [resolvable:$true] %s1486
      %1489 = dma.vmem_to_hbm [thread:$0]  %s1487, 32, %s4, [#allocation5]
    $region25: #{tpu_custom_call.1} parent=1 // pred_fallthru
      _
    // Predicated region
    $region26: #{tpu_custom_call.1} parent=1 // pred_check
      _
    $region27: #{tpu_custom_call.1} parent=1 // pred_check_branch
      %1491 = sbr.rel (0) target = $region29
    $region28: #{tpu_custom_call.1} parent=1 // pred_region
      %1492 = dma.done [#allocation5], 32
    $region29: #{tpu_custom_call.1} parent=1 // pred_fallthru
      _
    %1493 = vsyncpa [#allocation4], 1
    %1494 = vsyncpa [#allocation5], 1

</llo_original>
